<compile_context>
chip_gen: v6e
topology: v6e:2x2x1
jax: 0.10.0
libtpu: 0.0.40
codegen_flags: <defaults>
</compile_context>

<pallas_src>
import functools

import jax
import jax.numpy as jnp
from jax.experimental import pallas as pl
from jax.experimental.pallas import tpu as pltpu


def _round_up(x, m):
    return (x + m - 1) // m * m


def _divisors(n):
    out = set()
    i = 1
    while i * i <= n:
        if n % i == 0:
            out.add(i)
            out.add(n // i)
        i += 1
    return sorted(out)


def _pick_row_tile(r, row_bytes, weight_bytes, budget=32 << 20, min_steps=8):
    """Largest row tile that (a) divides R, (b) keeps the double-buffered
    working set under `budget` (sized for v7x's 64 MiB VMEM/TC; v5e/v6e with
    128 MiB can raise it), and (c) leaves >= min_steps grid steps so the
    'parallel' grid axis pipelines and load-balances across two TensorCores."""
    cap = max(8, (budget - 2 * weight_bytes) // (2 * row_bytes))
    divs = [d for d in _divisors(r) if d <= cap]
    for pred in (lambda d: d % 16 == 0 and r // d >= min_steps,
                 lambda d: d % 8 == 0 and r // d >= min_steps,
                 lambda d: r // d >= min_steps,
                 lambda d: d % 16 == 0,
                 lambda d: True):
        sel = [d for d in divs if pred(d)]
        if sel:
            return max(sel)
    return r


def _pick_pool_tile(hp, n, row_bytes, budget=2 << 20, min_steps=8):
    """Row-strip height for the spatially tiled pool pass."""
    divs = [t for t in _divisors(hp) if t * row_bytes <= budget]
    if not divs:
        return 1
    good = [t for t in divs if n * (hp // t) >= min_steps]
    return max(good) if good else max(divs)


# --------------------- pass 1: conv matmul (+ BN partials / fused affine) ----


def _conv_stats_kernel(p_ref, w_ref, y_ref, st_ref):
    # (tile_r, KH*KW*Cin) @ (KH*KW*Cin, Coutp): one MXU matmul, bf16 in / f32 acc.
    acc = jnp.dot(p_ref[...], w_ref[...], preferred_element_type=jnp.float32)
    y_ref[...] = acc.astype(y_ref.dtype)              # bf16 intermediate
    rows = acc.shape[0]
    s = jnp.sum(acc, axis=0, keepdims=True)            # (1, Coutp)
    d = acc - s / rows                                  # mean-shifted partial
    m2 = jnp.sum(d * d, axis=0, keepdims=True)
    st_ref[0] = jnp.concatenate([s, m2], axis=0)        # single (2, Coutp) store


def _conv_fused_kernel(p_ref, w_ref, s_ref, b_ref, o_ref, *, relu):
    # batchnorm=False path: scale/shift known before launch -> fuse into pass 1.
    acc = jnp.dot(p_ref[...], w_ref[...], preferred_element_type=jnp.float32)
    z = acc * s_ref[...] + b_ref[...]
    if relu:
        z = jnp.maximum(z, 0.0)
    o_ref[...] = z.astype(o_ref.dtype)


# --------------------- pass 2: per-channel affine + ReLU (+ fused pool) ------


def _affine_relu_kernel(y_ref, s_ref, b_ref, o_ref, *, relu):
    z = y_ref[...].astype(jnp.float32) * s_ref[...] + b_ref[...]
    if relu:
        z = jnp.maximum(z, 0.0)
    o_ref[...] = z


def _affine_relu_pool_kernel(y_ref, s_ref, b_ref, o_ref, *, relu, pool, coutp):
    # y_ref: (1, TH, pool, Wp, pool*Coutp); o_ref: (1, TH, Wp, Coutp).
    # H pool window = outer-dim integer index (free view); W pool window =
    # lane-contiguous 128-aligned static slice.  No strided reads anywhere.
    s = s_ref[...]                                      # (1, Coutp)
    b = b_ref[...]
    out = None
    for di in range(pool):
        blk = y_ref[0, :, di, :, :].astype(jnp.float32)  # (TH, Wp, pool*Coutp)
        for dj in range(pool):
            v = blk[:, :, dj * coutp:(dj + 1) * coutp]   # (TH, Wp, Coutp)
            v = v * s + b
            if relu:
                v = jnp.maximum(v, 0.0)
            out = v if out is None else jnp.maximum(out, v)
    o_ref[0] = out


# --------------------- wrapper ------------------------------------------------


def conv_block(x_nchw, weight_oihw, bias, gamma, beta, *,
               padding=1, eps=1e-5, bias_flag=True, batchnorm=True,
               relu=True, pool_size=None, mxu_dtype=jnp.bfloat16):
    N, Cin, H, W = x_nchw.shape
    Cout, _, KH, KW = weight_oihw.shape
    Ho = H + 2 * padding - KH + 1
    Wo = W + 2 * padding - KW + 1
    R = N * Ho * Wo
    Kc = KH * KW * Cin
    Coutp = _round_up(Cout, 128)                        # lane-dense stores

    # ---- glue: NHWC + pad + im2col, all in bf16 (cast before the 9x copy) ----
    x = jnp.transpose(x_nchw, (0, 2, 3, 1)).astype(mxu_dtype)
    xp = jnp.pad(x, ((0, 0), (padding, padding), (padding, padding), (0, 0)))
    # TODO(synk): this still materializes KH*KW shifted bf16 copies of the input
    # in HBM; eliminating it entirely needs in-kernel halo'd tap extraction.
    patches = jnp.concatenate(
        [xp[:, kh:kh + Ho, kw:kw + Wo, :] for kh in range(KH) for kw in range(KW)],
        axis=-1).reshape(R, Kc)

    w_folded = jnp.transpose(weight_oihw, (2, 3, 1, 0)).reshape(Kc, Cout)
    w_folded = jnp.pad(w_folded, ((0, 0), (0, Coutp - Cout))).astype(mxu_dtype)

    row_bytes = Kc * 2 + Coutp * 2                      # bf16 patch row + bf16 y row
    w_bytes = Kc * Coutp * 2
    tile_r = _pick_row_tile(R, row_bytes, w_bytes)
    nt = R // tile_r
    # vmem_limit sized for v7x (64 MiB/TC); v5e/v6e (128 MiB) can raise it and
    # grow the tile budget / add pl.Buffered(3) on the patch spec.
    cparams = pltpu.CompilerParams(dimension_semantics=("parallel",),
                                   vmem_limit_bytes=48 * 1024 * 1024)

    if batchnorm:
        # ---- pass 1: conv matmul + per-tile mean-shifted BN partials ----
        y, stats = pl.pallas_call(
            _conv_stats_kernel,
            out_shape=(jax.ShapeDtypeStruct((R, Coutp), jnp.bfloat16),
                       jax.ShapeDtypeStruct((nt, 2, Coutp), jnp.float32)),
            grid_spec=pltpu.PrefetchScalarGridSpec(
                num_scalar_prefetch=0, grid=(nt,),
                in_specs=[pl.BlockSpec((tile_r, Kc), lambda i: (i, 0)),
                          pl.BlockSpec((Kc, Coutp), lambda i: (0, 0))],
                out_specs=[pl.BlockSpec((tile_r, Coutp), lambda i: (i, 0)),
                           pl.BlockSpec((1, 2, Coutp), lambda i: (i, 0, 0))]),
            compiler_params=cparams,
        )(patches, w_folded)

        # Chan's parallel-variance combine of per-tile (sum, M2) partials.
        cnt = jnp.float32(R)
        sums = stats[:, 0, :Cout]
        m2s = stats[:, 1, :Cout]
        mean = jnp.sum(sums, axis=0) / cnt
        tile_means = sums / jnp.float32(tile_r)
        m2 = jnp.sum(m2s, axis=0) + jnp.float32(tile_r) * jnp.sum(
            jnp.square(tile_means - mean), axis=0)
        var = jnp.maximum(m2, 0.0) / cnt                # biased (training) variance
        scale_c = gamma.astype(jnp.float32) * jax.lax.rsqrt(var + eps)
        shift_c = beta.astype(jnp.float32) - mean * scale_c
        # Conv bias is cancelled by the mean subtraction -> skipped entirely.
        scale = jnp.pad(scale_c, (0, Coutp - Cout)).reshape(1, Coutp)
        shift = jnp.pad(shift_c, (0, Coutp - Cout)).reshape(1, Coutp)
        need_pass2 = True
    else:
        # ---- batchnorm=False: scale/shift launch-known -> fuse into pass 1 ----
        scale_c = jnp.ones((Cout,), jnp.float32)
        shift_c = (bias.astype(jnp.float32) if bias_flag
                   else jnp.zeros((Cout,), jnp.float32))
        scale = jnp.pad(scale_c, (0, Coutp - Cout)).reshape(1, Coutp)
        shift = jnp.pad(shift_c, (0, Coutp - Cout)).reshape(1, Coutp)
        y_dtype = jnp.bfloat16 if pool_size else jnp.float32
        y = pl.pallas_call(
            functools.partial(_conv_fused_kernel, relu=relu),
            out_shape=jax.ShapeDtypeStruct((R, Coutp), y_dtype),
            grid_spec=pltpu.PrefetchScalarGridSpec(
                num_scalar_prefetch=0, grid=(nt,),
                in_specs=[pl.BlockSpec((tile_r, Kc), lambda i: (i, 0)),
                          pl.BlockSpec((Kc, Coutp), lambda i: (0, 0)),
                          pl.BlockSpec((1, Coutp), lambda i: (0, 0)),
                          pl.BlockSpec((1, Coutp), lambda i: (0, 0))],
                out_specs=pl.BlockSpec((tile_r, Coutp), lambda i: (i, 0))),
            compiler_params=cparams,
        )(patches, w_folded, scale, shift)
        need_pass2 = False

    # ---- pass 2: affine + ReLU, with MaxPool fused in when requested ----
    if pool_size:
        p = pool_size
        Hp2, Wp2 = Ho // p, Wo // p                     # PyTorch ceil_mode=False
        y4 = y.reshape(N, Ho, Wo, Coutp)
        if Hp2 * p != Ho or Wp2 * p != Wo:
            y4 = y4[:, :Hp2 * p, :Wp2 * p, :]
        # Free reshape: W window -> lane-contiguous channel groups, H window ->
        # outer dim; avoids p*p sublane-strided gathers in the kernel.
        y5 = y4.reshape(N, Hp2, p, Wp2, p * Coutp)
        if need_pass2:
            s_in, b_in, relu_in = scale, shift, relu
        else:
            s_in = jnp.ones((1, Coutp), jnp.float32)     # already applied in pass 1
            b_in = jnp.zeros((1, Coutp), jnp.float32)
            relu_in = False
        th = _pick_pool_tile(Hp2, N, p * Wp2 * p * Coutp * y5.dtype.itemsize)
        out = pl.pallas_call(
            functools.partial(_affine_relu_pool_kernel, relu=relu_in,
                              pool=p, coutp=Coutp),
            out_shape=jax.ShapeDtypeStruct((N, Hp2, Wp2, Coutp), jnp.float32),
            grid_spec=pltpu.PrefetchScalarGridSpec(
                num_scalar_prefetch=0, grid=(N, Hp2 // th),
                in_specs=[pl.BlockSpec((1, th, p, Wp2, p * Coutp),
                                       lambda n, h: (n, h, 0, 0, 0)),
                          pl.BlockSpec((1, Coutp), lambda n, h: (0, 0)),
                          pl.BlockSpec((1, Coutp), lambda n, h: (0, 0))],
                out_specs=pl.BlockSpec((1, th, Wp2, Coutp),
                                       lambda n, h: (n, h, 0, 0))),
            compiler_params=pltpu.CompilerParams(
                dimension_semantics=("parallel", "parallel"),
                vmem_limit_bytes=48 * 1024 * 1024),
        )(y5, s_in, b_in)
        out = out[..., :Cout]
        return jnp.transpose(out, (0, 3, 1, 2))         # back to NCHW (module API)

    if need_pass2:
        z = pl.pallas_call(
            functools.partial(_affine_relu_kernel, relu=relu),
            out_shape=jax.ShapeDtypeStruct((R, Coutp), jnp.float32),
            grid_spec=pltpu.PrefetchScalarGridSpec(
                num_scalar_prefetch=0, grid=(nt,),
                in_specs=[pl.BlockSpec((tile_r, Coutp), lambda i: (i, 0)),
                          pl.BlockSpec((1, Coutp), lambda i: (0, 0)),
                          pl.BlockSpec((1, Coutp), lambda i: (0, 0))],
                out_specs=pl.BlockSpec((tile_r, Coutp), lambda i: (i, 0))),
            compiler_params=cparams,
        )(y, scale, shift)
    else:
        z = y                                            # fused in pass 1, already f32
    z = z.reshape(N, Ho, Wo, Coutp)[..., :Cout]
    return jnp.transpose(z, (0, 3, 1, 2))                # back to NCHW (module API)


def _reference(x, w, b, gamma, beta, *, padding, eps, batchnorm, relu, pool_size):
    """Pure-JAX reference matching the PyTorch ConvBlock forward."""
    y = jax.lax.conv_general_dilated(
        x, w, window_strides=(1, 1), padding=[(padding, padding)] * 2,
        dimension_numbers=("NCHW", "OIHW", "NCHW"))
    y = y + b[None, :, None, None]
    if batchnorm:
        mean = jnp.mean(y, axis=(0, 2, 3), keepdims=True)
        var = jnp.mean(jnp.square(y - mean), axis=(0, 2, 3), keepdims=True)
        y = (y - mean) / jnp.sqrt(var + eps)
        y = y * gamma[None, :, None, None] + beta[None, :, None, None]
    if relu:
        y = jnp.maximum(y, 0.0)
    if pool_size:
        y = jax.lax.reduce_window(
            y, -jnp.inf, jax.lax.max,
            (1, 1, pool_size, pool_size), (1, 1, pool_size, pool_size), "VALID")
    return y


if __name__ == "__main__":
    # TODO(synk): BatchNorm running_mean/running_var buffer updates (training
    # side effect) are not modeled; only the forward output is reproduced.
    key = jax.random.PRNGKey(0)
    kx, kw, kb = jax.random.split(key, 3)

    N, Cin, H, W = 2, 4, 16, 16
    Cout, K = 8, 3

    x = jax.random.normal(kx, (N, Cin, H, W), jnp.float32)
    w = jax.random.normal(kw, (Cout, Cin, K, K), jnp.float32) * 0.1
    b = jax.random.normal(kb, (Cout,), jnp.float32) * 0.1
    gamma = jnp.ones((Cout,), jnp.float32)   # BatchNorm2d weight init
    beta = jnp.zeros((Cout,), jnp.float32)   # BatchNorm2d bias init

    # MXU inputs are bf16 (f32 accumulate): compare against a reference fed
    # bf16-rounded x/w so products match.
    x_bf = x.astype(jnp.bfloat16).astype(jnp.float32)
    w_bf = w.astype(jnp.bfloat16).astype(jnp.float32)

    # BN paths store the R x Coutp conv intermediate in bf16 (perf feedback),
    # so the normalized output carries ~2^-9 relative rounding -> 5e-2 check.
    out = jax.block_until_ready(conv_block(x, w, b, gamma, beta))
    ref = _reference(x_bf, w_bf, b, gamma, beta, padding=1, eps=1e-5,
                     batchnorm=True, relu=True, pool_size=None)
    assert out.shape == ref.shape == (N, Cout, H, W)
    assert jnp.allclose(out, ref, atol=5e-2, rtol=5e-2), \
        float(jnp.max(jnp.abs(out - ref)))

    # With pooling (pool_size=2): spatially tiled fused affine+ReLU+MaxPool pass.
    out_p = jax.block_until_ready(conv_block(x, w, b, gamma, beta, pool_size=2))
    ref_p = _reference(x_bf, w_bf, b, gamma, beta, padding=1, eps=1e-5,
                       batchnorm=True, relu=True, pool_size=2)
    assert out_p.shape == ref_p.shape == (N, Cout, H // 2, W // 2)
    assert jnp.allclose(out_p, ref_p, atol=5e-2, rtol=5e-2), \
        float(jnp.max(jnp.abs(out_p - ref_p)))

    # No batchnorm: bias + ReLU fused into pass 1, f32 end-to-end after the MXU.
    out_nb = jax.block_until_ready(
        conv_block(x, w, b, gamma, beta, batchnorm=False))
    ref_nb = _reference(x_bf, w_bf, b, gamma, beta, padding=1, eps=1e-5,
                        batchnorm=False, relu=True, pool_size=None)
    assert jnp.allclose(out_nb, ref_nb, atol=1e-3, rtol=1e-3), \
        float(jnp.max(jnp.abs(out_nb - ref_nb)))

    print("KERNEL_OK")
</pallas_src>

<mosaic_0001>
module attributes {stable_mosaic.version = 11 : i64} {
  func.func @_conv_stats_kernel(%arg0: i32, %arg1: memref<64x36xbf16, #tpu.memory_space<vmem>>, %arg2: memref<36x128xbf16, #tpu.memory_space<vmem>>, %arg3: memref<64x128xbf16, #tpu.memory_space<vmem>>, %arg4: memref<1x2x128xf32, #tpu.memory_space<vmem>>) attributes {dimension_semantics = [#tpu.dimension_semantics<parallel>], iteration_bounds = array<i64: 8>, scalar_prefetch = 0 : i64, scratch_operands = 0 : i64, tpu.core_type = #tpu.core_type<tc>, window_params = [{transform_indices = @transform_0, window_bounds = array<i64: 64, 36>}, {pipeline_mode = #tpu.pipeline_mode<synchronous>, transform_indices = @transform_1, window_bounds = array<i64: 36, 128>}, {transform_indices = @transform_2, window_bounds = array<i64: 64, 128>}, {transform_indices = @transform_3, window_bounds = array<i64: 1, 2, 128>}]} {
    %c0 = arith.constant 0 : index
    %c0_0 = arith.constant 0 : index
    %0 = vector.load %arg1[%c0, %c0_0] : memref<64x36xbf16, #tpu.memory_space<vmem>>, vector<64x36xbf16>
    %c0_1 = arith.constant 0 : index
    %c0_2 = arith.constant 0 : index
    %1 = vector.load %arg2[%c0_1, %c0_2] : memref<36x128xbf16, #tpu.memory_space<vmem>>, vector<36x128xbf16>
    %cst = arith.constant dense<0.000000e+00> : vector<64x128xf32>
    %2 = tpu.matmul %0, %1, %cst {dimension_numbers = #tpu.dot_dimension_numbers<[1], [0], [0], [1], [0, 0, 1, 1], [], []>} : vector<64x36xbf16>, vector<36x128xbf16>, vector<64x128xf32> -> vector<64x128xf32>
    %3 = arith.truncf %2 : vector<64x128xf32> to vector<64x128xbf16>
    %c0_3 = arith.constant 0 : index
    %c0_4 = arith.constant 0 : index
    %4 = vector.load %arg3[%c0_3, %c0_4] : memref<64x128xbf16, #tpu.memory_space<vmem>>, vector<64x128xbf16>
    tpu.vector_store %arg3[%c0_3, %c0_4], %3 {strides = array<i32>} : memref<64x128xbf16, #tpu.memory_space<vmem>>, vector<64x128xbf16>,
    %cst_5 = arith.constant dense<0.000000e+00> : vector<128xf32>
    %5 = vector.multi_reduction <add>, %2, %cst_5 [0] : vector<64x128xf32> to vector<128xf32>
    %6 = vector.shape_cast %5 : vector<128xf32> to vector<1x128xf32>
    %cst_6 = arith.constant 6.400000e+01 : f32
    %7 = vector.broadcast %cst_6 : f32 to vector<1x128xf32>
    %8 = arith.divf %6, %7 : vector<1x128xf32>
    %9 = vector.broadcast %8 : vector<1x128xf32> to vector<64x128xf32>
    %10 = arith.subf %2, %9 : vector<64x128xf32>
    %11 = arith.mulf %10, %10 : vector<64x128xf32>
    %cst_7 = arith.constant dense<0.000000e+00> : vector<128xf32>
    %12 = vector.multi_reduction <add>, %11, %cst_7 [0] : vector<64x128xf32> to vector<128xf32>
    %13 = vector.shape_cast %12 : vector<128xf32> to vector<1x128xf32>
    %14 = tpu.concatenate %6, %13 in 0 : vector<1x128xf32>, vector<1x128xf32> -> vector<2x128xf32>
    %c0_8 = arith.constant 0 : index
    %c0_9 = arith.constant 0 : index
    %c0_10 = arith.constant 0 : index
    %15 = vector.load %arg4[%c0_8, %c0_9, %c0_10] : memref<1x2x128xf32, #tpu.memory_space<vmem>>, vector<1x2x128xf32>
    %16 = vector.shape_cast %15 : vector<1x2x128xf32> to vector<2x128xf32>
    %17 = vector.shape_cast %14 : vector<2x128xf32> to vector<1x2x128xf32>
    tpu.vector_store %arg4[%c0_8, %c0_9, %c0_10], %17 {strides = array<i32>} : memref<1x2x128xf32, #tpu.memory_space<vmem>>, vector<1x2x128xf32>,
    return
  }
  func.func @transform_0(%arg0: i32) -> (i32, i32) {
    %c0_i32 = arith.constant 0 : i32
    %c0_i32_0 = arith.constant 0 : i32
    return %arg0, %c0_i32 : i32, i32
  }
  func.func @transform_1(%arg0: i32) -> (i32, i32) {
    %c0_i32 = arith.constant 0 : i32
    %c0_i32_0 = arith.constant 0 : i32
    %c0_i32_1 = arith.constant 0 : i32
    return %c0_i32, %c0_i32_0 : i32, i32
  }
  func.func @transform_2(%arg0: i32) -> (i32, i32) {
    %c0_i32 = arith.constant 0 : i32
    %c0_i32_0 = arith.constant 0 : i32
    return %arg0, %c0_i32 : i32, i32
  }
  func.func @transform_3(%arg0: i32) -> (i32, i32, i32) {
    %c0_i32 = arith.constant 0 : i32
    %c0_i32_0 = arith.constant 0 : i32
    %c0_i32_1 = arith.constant 0 : i32
    return %arg0, %c0_i32, %c0_i32_0 : i32, i32, i32
  }
}

</mosaic_0001>

<llo_original>
// kernel: tpu_custom_call.1
$region0: #{tpu_custom_call.1}
  #allocation0 [shape = 'u32[]', space=smem, size = 0x4, offset = 0x4, fixed_abs, tag = 'smem constant byte address 0x4 - core index']
  #allocation1 [shape = 'u32[144,128]{1,0:T(1,128)}', space=vmem, size = 0x12000, scoped, tag = 'internal scratch']
  %s0 = inlined_call_operand.vmem [shape: bf16[512,36], index: 0, kind: input, shape index: {}]
  %s1 = inlined_call_operand.vmem [shape: bf16[36,128], index: 1, kind: input, shape index: {}]
  %s2 = inlined_call_operand.hbm [shape: bf16[512,128], index: 2, kind: output, shape index: {0}]
  %s3 = inlined_call_operand.hbm [shape: f32[8,2,128], index: 3, kind: output, shape index: {1}]
  %4 = xla_tuple %s2, %s3
  %s5 = sld [smem:[#allocation0]]
  $region49: #{tpu_custom_call.1} parent=0
    _
  %s7 = ssub.s32 1, %s5
  %s8 = scalar_select 0, %s7, %s5
  $region1: #{tpu_custom_call.1} parent=0
    #allocation2 [shape = 'u8[32768]{0}', space=vmem, size = 0x8000, scoped, tag = 'output window, operand 0']
    #allocation3 [shape = 's32[2]{0}', space=sflag, size = 0x8, scoped, tag = 'scoped memory for tpu_custom_call.1']
    #allocation4 [shape = 'u8[2048]{0}', space=vmem, size = 0x800, scoped, tag = 'output window, operand 1']
    #allocation5 [shape = 's32[2]{0}', space=sflag, size = 0x8, scoped, tag = 'scoped memory for tpu_custom_call.1']
    %9 = vsyncpa [#allocation3], 0
    %s10 = scalar_lea.sflag [#allocation3], 1
    %11 = vsyncpa %s10, 0
    %12 = vsyncpa [#allocation5], 0
    %s13 = scalar_lea.sflag [#allocation5], 1
    %14 = vsyncpa %s13, 0
    loop: start=0, step=1, limit=10
    $region2: #{tpu_custom_call.1} parent=1 // loop_pre_header
      _
    $region3: #{tpu_custom_call.1} parent=1 // loop_header
      %s16 = sphi 0, %s20
      %p17 = scmp.ge.s32.totalorder %s16, 10
      %s26 = sphi 0, %s28
      %s29 = sphi 0, %s26
      %s30 = sphi 0, %s29
      %s46 = sphi 0, %s30
      %s50 = sphi 0, %s50
      %s52 = sphi 0, %s50
      %s53 = sphi 0, %s52
      %s67 = sphi 0, %s53
      %s73 = sphi 0, %s75
      %s76 = sphi 0, %s73
      %s77 = sphi 0, %s76
      %s93 = sphi 0, %s77
      %s99 = sphi 0, %s101
      %s102 = sphi 0, %s99
      %s103 = sphi 0, %s102
      %s119 = sphi 0, %s103
    $region4: #{tpu_custom_call.1} parent=1 // loop_header_branch
      %19 = sbr.rel (%p17) target = $region8
    $region5: #{tpu_custom_call.1} parent=1 // loop_body
      %s21 = ssub.s32 %s16, 1
      %s22 = ssub.s32 %s16, 2
      %s23 = sadd.s32 %s16, 1
      %s24 = ssub.s32 %s16, %s23
      %p25 = scmp.eq.s32.totalorder %s24, 0
      %s27 = sadd.s32 %s26, 1
      %s28 = scalar_select %p25, %s26, %s27
      %p31 = pneg %p25
      %p32 = scmp.eq.s32.totalorder %s16, 7
      %p33 = por %p31, %p32
      %p34 = scmp.ne.s32.totalorder %s26, %s29
      %p35 = scmp.eq.s32.totalorder %s16, 0
      %p36 = por %p34, %p35
      %p37 = scmp.ne.s32.totalorder %s26, %s29
      %p38 = scmp.eq.s32.totalorder %s21, 7
      %p39 = por %p37, %p38
      %p40 = scmp.ne.s32.totalorder %s29, %s30
      %p41 = scmp.eq.s32.totalorder %s21, 0
      %p42 = por %p40, %p41
      %p43 = scmp.ne.s32.totalorder %s29, %s30
      %p44 = scmp.eq.s32.totalorder %s22, 7
      %p45 = por %p43, %p44
      %p47 = scmp.ne.s32.totalorder %s30, %s46
      %p48 = scmp.eq.s32.totalorder %s22, 0
      %p49 = por %p47, %p48
      %s51 = sadd.s32 %s50, 1
      %p54 = scmp.eq.s32.totalorder %s16, 7
      %p55 = scmp.ne.s32.totalorder %s50, %s52
      %p56 = scmp.eq.s32.totalorder %s16, 0
      %p57 = por %p55, %p56
      %p58 = scmp.ne.s32.totalorder %s50, %s52
      %p59 = scmp.eq.s32.totalorder %s21, 7
      %p60 = por %p58, %p59
      %p61 = scmp.ne.s32.totalorder %s52, %s53
      %p62 = scmp.eq.s32.totalorder %s21, 0
      %p63 = por %p61, %p62
      %p64 = scmp.ne.s32.totalorder %s52, %s53
      %p65 = scmp.eq.s32.totalorder %s22, 7
      %p66 = por %p64, %p65
      %p68 = scmp.ne.s32.totalorder %s53, %s67
      %p69 = scmp.eq.s32.totalorder %s22, 0
      %p70 = por %p68, %p69
      %s71 = ssub.s32 %s16, %s23
      %p72 = scmp.eq.s32.totalorder %s71, 0
      %s74 = sadd.s32 %s73, 1
      %s75 = scalar_select %p72, %s73, %s74
      %p78 = pneg %p72
      %p79 = scmp.eq.s32.totalorder %s16, 7
      %p80 = por %p78, %p79
      %p81 = scmp.ne.s32.totalorder %s73, %s76
      %p82 = scmp.eq.s32.totalorder %s16, 0
      %p83 = por %p81, %p82
      %p84 = scmp.ne.s32.totalorder %s73, %s76
      %p85 = scmp.eq.s32.totalorder %s21, 7
      %p86 = por %p84, %p85
      %p87 = scmp.ne.s32.totalorder %s76, %s77
      %p88 = scmp.eq.s32.totalorder %s21, 0
      %p89 = por %p87, %p88
      %p90 = scmp.ne.s32.totalorder %s76, %s77
      %p91 = scmp.eq.s32.totalorder %s22, 7
      %p92 = por %p90, %p91
      %p94 = scmp.ne.s32.totalorder %s77, %s93
      %p95 = scmp.eq.s32.totalorder %s22, 0
      %p96 = por %p94, %p95
      %s97 = ssub.s32 %s16, %s23
      %p98 = scmp.eq.s32.totalorder %s97, 0
      %s100 = sadd.s32 %s99, 1
      %s101 = scalar_select %p98, %s99, %s100
      %p104 = pneg %p98
      %p105 = scmp.eq.s32.totalorder %s16, 7
      %p106 = por %p104, %p105
      %p107 = scmp.ne.s32.totalorder %s99, %s102
      %p108 = scmp.eq.s32.totalorder %s16, 0
      %p109 = por %p107, %p108
      %p110 = scmp.ne.s32.totalorder %s99, %s102
      %p111 = scmp.eq.s32.totalorder %s21, 7
      %p112 = por %p110, %p111
      %p113 = scmp.ne.s32.totalorder %s102, %s103
      %p114 = scmp.eq.s32.totalorder %s21, 0
      %p115 = por %p113, %p114
      %p116 = scmp.ne.s32.totalorder %s102, %s103
      %p117 = scmp.eq.s32.totalorder %s22, 7
      %p118 = por %p116, %p117
      %p120 = scmp.ne.s32.totalorder %s103, %s119
      %p121 = scmp.eq.s32.totalorder %s22, 0
      %p122 = por %p120, %p121
      %p123 = scmp.le.s32.totalorder 1, %s16
      %p124 = scmp.lt.s32.totalorder %s16, 9
      %p125 = pnand %p123, %p124
      %p126 = pneg %p125
      // Predicated region
      $region9: #{tpu_custom_call.1} parent=5 // pred_check
        _
      $region10: #{tpu_custom_call.1} parent=5 // pred_check_branch
        %128 = sbr.rel (%p125) target = $region12
      $region11: #{tpu_custom_call.1} parent=5 // pred_region
        %s129 = ssub.s32 %s16, 1
        // Predicated region
        $region13: #{tpu_custom_call.1} parent=11 // pred_check
          %p130 = pneg %p63
        $region14: #{tpu_custom_call.1} parent=11 // pred_check_branch
          %132 = sbr.rel (%p130) target = $region16
        $region15: #{tpu_custom_call.1} parent=11 // pred_region
          _
        $region16: #{tpu_custom_call.1} parent=11 // pred_fallthru
          _
      $region12: #{tpu_custom_call.1} parent=5 // pred_fallthru
        _
      %p133 = scmp.lt.s32.totalorder %s16, 8
      // Predicated region
      $region17: #{tpu_custom_call.1} parent=5 // pred_check
        %p134 = pneg %p133
      $region18: #{tpu_custom_call.1} parent=5 // pred_check_branch
        %136 = sbr.rel (%p134) target = $region20
      $region19: #{tpu_custom_call.1} parent=5 // pred_region
        // Predicated region
        $region21: #{tpu_custom_call.1} parent=19 // pred_check
          %p137 = pneg %p36
        $region22: #{tpu_custom_call.1} parent=19 // pred_check_branch
          %139 = sbr.rel (%p137) target = $region24
        $region23: #{tpu_custom_call.1} parent=19 // pred_region
          %s140 = smul.u32 8, %s16
          %p141 = scmp.lt.s32.totalorder %s140, 63
          %s142 = scalar_select %p141, %s140, 63
          %s143 = smul.addr %s142, 4
          %s144 = scalar_lea.vmem %s0, %s143
          %s145 = smul.u32 8, %s16
        $region24: #{tpu_custom_call.1} parent=19 // pred_fallthru
          _
      $region20: #{tpu_custom_call.1} parent=5 // pred_fallthru
        _
      %p146 = scmp.le.s32.totalorder 1, %s16
      %p147 = scmp.lt.s32.totalorder %s16, 9
      %p148 = pnand %p146, %p147
      %p149 = pneg %p148
      // Predicated region
      $region25: #{tpu_custom_call.1} parent=5 // pred_check
        _
      $region26: #{tpu_custom_call.1} parent=5 // pred_check_branch
        %151 = sbr.rel (%p148) target = $region28
      $region27: #{tpu_custom_call.1} parent=5 // pred_region
        %s152 = ssub.s32 %s16, 1
        %s153 = smul.u32 8, %s21
        %p154 = scmp.lt.s32.totalorder %s153, 63
        %s155 = scalar_select %p154, %s153, 63
        %s156 = smul.addr %s155, 4
        %s157 = scalar_lea.vmem %s0, %s156
        %p158 = pneg %p42
        %p159 = pneg %p39
        %p160 = pneg %p63
        %p161 = pneg %p60
        %p162 = pneg %p89
        %p163 = pneg %p86
        %s164 = sand.u32 %s76, 1
        %s165 = scalar_lea.sflag [#allocation3], %s164
        %s166 = sand.u32 %s76, 1
        %s167 = smul.addr %s166, 32
        %s168 = scalar_lea.vmem [#allocation2], %s167
        %p169 = pneg %p115
        %p170 = pneg %p112
        %s171 = sand.u32 %s102, 1
        %s172 = scalar_lea.sflag [#allocation5], %s171
        %s173 = sand.u32 %s102, 1
        %s174 = smul.addr %s173, 2
        %s175 = scalar_lea.vmem [#allocation4], %s174
        %s176 = smul.u32 8, %s21
        %p177 = scmp.lt.s32.totalorder %s176, 63
        %s178 = scalar_select %p177, %s176, 63
        %s179 = smul.addr %s178, 4
        %s180 = scalar_lea.vmem %s0, %s179
        %s181 = smul.u32 8, %s21
        %s182 = smul.u32 8, %s21
        %v184 = vld [vmem:[%s180] sm:$0xf]
        %v185 = vld [vmem:[%s180 + $0x4] sm:$0xf]
        %v186 = vld [vmem:[%s180 + $0x8] sm:$0xf]
        %v187 = vld [vmem:[%s180 + $0xc] sm:$0xf]
        %v188 = vld [vmem:[%s180 + $0x10] sm:$0xf]
        %v189 = vld [vmem:[%s180 + $0x14] sm:$0xf]
        %v190 = vld [vmem:[%s180 + $0x18] sm:$0xf]
        %v191 = vld [vmem:[%s180 + $0x1c] sm:$0xf]
        %v192 = vld [vmem:[%s1] sm:$0xf]
        %v193 = vld [vmem:[%s1 + $0x4] sm:$0xf]
        %v194 = vld [vmem:[%s1 + $0x8] sm:$0xf]
        %v195 = vld [vmem:[%s1 + $0xc] sm:$0xf]
        %v196 = vld [vmem:[%s1 + $0x10] sm:$0x3]
        %v205 = vunpack.c.l.b16 %v184
        %v206 = vunpack.c.l.b16 %v185
        %v207 = vunpack.c.l.b16 %v186
        %v208 = vunpack.c.l.b16 %v187
        %v209 = vunpack.c.l.b16 %v188
        %v210 = vunpack.c.l.b16 %v189
        %v211 = vunpack.c.l.b16 %v190
        %v212 = vunpack.c.l.b16 %v191
        %v213 = vpack.c.b16 %v206, %v205
        %v214 = vpack.c.b16 %v208, %v207
        %v215 = vpack.c.b16 %v210, %v209
        %v216 = vpack.c.b16 %v212, %v211
        %v222 = vunpack.c.l.b16 %v192
        %v223 = vunpack.c.l.b16 %v193
        %v224 = vunpack.c.l.b16 %v194
        %v225 = vunpack.c.l.b16 %v195
        %v226 = vunpack.c.l.b16 %v196
        %v227 = vpack.c.b16 %v223, %v222
        %v228 = vpack.c.b16 %v225, %v224
        %v229 = vpack.c.b16 %v226, %v226
        %vm232 = vcmask 293888
        %v234 = vsel %vm232, %v213, 0
        %v237 = vsel %vm232, %v214, 0
        %v240 = vsel %vm232, %v215, 0
        %v243 = vsel %vm232, %v216, 0
        %vm245 = vcmask 1041408
        %v247 = vsel %vm245, %v229, 0
        %249 = vmatprep.subr.bf16.mxu0 0
        %250 = vmatpush1.bf16.msra.mxu0 0
        %251 = vmatprep.subr.bf16.mxu0 0
        %252 = vmatpush1.bf16.msra.mxu0 0
        %253 = vmatprep.subr.bf16.mxu0 0
        %254 = vmatpush1.bf16.msra.mxu0 0
        %255 = vmatprep.subr.bf16.mxu0 0
        %256 = vmatpush1.bf16.msra.mxu0 0
        %257 = vmatprep.subr.bf16.mxu0 0
        %258 = vmatpush1.bf16.msra.mxu0 0
        %259 = vmatprep.subr.bf16.mxu0 0
        %260 = vmatpush1.bf16.msra.mxu0 %v247
        %261 = vmatprep.subr.bf16.mxu0 0
        %262 = vmatpush1.bf16.msra.mxu0 %v228
        %263 = vmatprep.subr.bf16.mxu0 0
        %264 = vmatpush1.bf16.msra.mxu0 %v227
        %265 = vmatprep.subr.bf16.mxu0 0
        %266 = vmatpush2.bf16.msra.mxu0 0
        %267 = vmatprep.subr.bf16.mxu0 0
        %268 = vmatpush2.bf16.msra.mxu0 0
        %269 = vmatprep.subr.bf16.mxu0 0
        %270 = vmatpush2.bf16.msra.mxu0 0
        %271 = vmatprep.subr.bf16.mxu0 0
        %272 = vmatpush2.bf16.msra.mxu0 0
        %273 = vmatprep.subr.bf16.mxu0 0
        %274 = vmatpush2.bf16.msra.mxu0 0
        %275 = vmatprep.subr.bf16.mxu0 0
        %276 = vmatpush2.bf16.msra.mxu0 0
        %277 = vmatprep.subr.bf16.mxu0 0
        %278 = vmatpush2.bf16.msra.mxu0 0
        %279 = vmatprep.subr.bf16.mxu0 0
        %280 = vmatpush2.bf16.msra.mxu0 0
        %281 = vmatprep.mubr.bf16.mxu0 0
        %282 = vmatmul.mubr.bf16.gmra.mxu0 %v234
        %v283 = vpop.f32.mrf.mxu0
        %v284 = vadd.f32 0.0, %v283
        %v285 = vpop.f32.mrf.mxu0
        %v286 = vpop.f32.mrf.mxu0
        %v287 = vadd.f32 0.0, %v286
        %v288 = vpop.f32.mrf.mxu0
        %289 = vmatprep.mubr.bf16.mxu0 0
        %290 = vmatmul.mubr.bf16.gmra.mxu0 %v237
        %v291 = vpop.f32.mrf.mxu0
        %v292 = vadd.f32 0.0, %v291
        %v293 = vpop.f32.mrf.mxu0
        %v294 = vpop.f32.mrf.mxu0
        %v295 = vadd.f32 0.0, %v294
        %v296 = vpop.f32.mrf.mxu0
        %297 = vmatprep.mubr.bf16.mxu0 0
        %298 = vmatmul.mubr.bf16.gmra.mxu0 %v240
        %v299 = vpop.f32.mrf.mxu0
        %v300 = vadd.f32 0.0, %v299
        %v301 = vpop.f32.mrf.mxu0
        %v302 = vpop.f32.mrf.mxu0
        %v303 = vadd.f32 0.0, %v302
        %v304 = vpop.f32.mrf.mxu0
        %305 = vmatprep.mubr.bf16.mxu0 0
        %306 = vmatmul.mubr.bf16.gmra.mxu0 %v243
        %v307 = vpop.f32.mrf.mxu0
        %v308 = vadd.f32 0.0, %v307
        %v309 = vpop.f32.mrf.mxu0
        %v310 = vpop.f32.mrf.mxu0
        %v311 = vadd.f32 0.0, %v310
        %v312 = vpop.f32.mrf.mxu0
        %313 = vdwg.mxu0
        %v314 = vpack.c.bf16 %v287, %v284
        %v315 = vpack.c.bf16 %v295, %v292
        %v316 = vpack.c.bf16 %v303, %v300
        %v317 = vpack.c.bf16 %v311, %v308
        %v322 = vunpack.c.l.b16 %v314
        %v323 = vunpack.c.h.b16 %v314
        %v324 = vunpack.c.l.b16 %v315
        %v325 = vunpack.c.h.b16 %v315
        %v326 = vunpack.c.l.b16 %v316
        %v327 = vunpack.c.h.b16 %v316
        %v328 = vunpack.c.l.b16 %v317
        %v329 = vunpack.c.h.b16 %v317
        %v330 = vpack.c.b16 %v322, %v322
        %v331 = vpack.c.b16 %v323, %v323
        %v332 = vpack.c.b16 %v324, %v324
        %v333 = vpack.c.b16 %v325, %v325
        %v334 = vpack.c.b16 %v326, %v326
        %v335 = vpack.c.b16 %v327, %v327
        %v336 = vpack.c.b16 %v328, %v328
        %v337 = vpack.c.b16 %v329, %v329
        %346 = vst [vmem:[%s168] sm:$0xf] %v330
        %347 = vst [vmem:[%s168 + $0x4] sm:$0xf] %v331
        %348 = vst [vmem:[%s168 + $0x8] sm:$0xf] %v332
        %349 = vst [vmem:[%s168 + $0xc] sm:$0xf] %v333
        %350 = vst [vmem:[%s168 + $0x10] sm:$0xf] %v334
        %351 = vst [vmem:[%s168 + $0x14] sm:$0xf] %v335
        %352 = vst [vmem:[%s168 + $0x18] sm:$0xf] %v336
        %353 = vst [vmem:[%s168 + $0x1c] sm:$0xf] %v337
        %v354 = vadd.f32 %v284, %v287
        %v355 = vadd.f32 %v354, %v292
        %v356 = vadd.f32 %v355, %v295
        %v357 = vadd.f32 %v356, %v300
        %v358 = vadd.f32 %v357, %v303
        %v359 = vadd.f32 %v358, %v308
        %v360 = vadd.f32 %v359, %v311
        %v361 = vrot.slane %v360, 4
        %v362 = vadd.f32 %v360, %v361
        %v363 = vrot.slane %v362, 2
        %v364 = vadd.f32 %v362, %v363
        %v365 = vrot.slane %v364, 1
        %v366 = vadd.f32 %v364, %v365
        %v367 = vrcp.pop 64.0
        %v368 = vmul.f32 %v366, %v367
        %v369 = vsub.f32 %v284, %v368
        %v370 = vsub.f32 %v287, %v368
        %v371 = vsub.f32 %v292, %v368
        %v372 = vsub.f32 %v295, %v368
        %v373 = vsub.f32 %v300, %v368
        %v374 = vsub.f32 %v303, %v368
        %v375 = vsub.f32 %v308, %v368
        %v376 = vsub.f32 %v311, %v368
        %v377 = vmul.f32 %v369, %v369
        %v378 = vmul.f32 %v370, %v370
        %v379 = vmul.f32 %v371, %v371
        %v380 = vmul.f32 %v372, %v372
        %v381 = vmul.f32 %v373, %v373
        %v382 = vmul.f32 %v374, %v374
        %v383 = vmul.f32 %v375, %v375
        %v384 = vmul.f32 %v376, %v376
        %v385 = vadd.f32 %v377, %v378
        %v386 = vadd.f32 %v385, %v379
        %v387 = vadd.f32 %v386, %v380
        %v388 = vadd.f32 %v387, %v381
        %v389 = vadd.f32 %v388, %v382
        %v390 = vadd.f32 %v389, %v383
        %v391 = vadd.f32 %v390, %v384
        %v392 = vrot.slane %v391, 4
        %v393 = vadd.f32 %v391, %v392
        %v394 = vrot.slane %v393, 2
        %v395 = vadd.f32 %v393, %v394
        %v396 = vrot.slane %v395, 1
        %v397 = vadd.f32 %v395, %v396
        %vm398 = vcmask 1040384
        %v399 = vsel %vm398, %v366, %v397
        %400 = vst [vmem:[%s175] sm:$0x3] %v399
        %s401 = sand.u32 %s76, 1
        %s402 = scalar_lea.sflag [#allocation3], %s401
        %s403 = sand.u32 %s76, 1
        %s404 = smul.addr %s403, 32
        %s405 = scalar_lea.vmem [#allocation2], %s404
        %s406 = sand.u32 %s102, 1
        %s407 = scalar_lea.sflag [#allocation5], %s406
        %s408 = sand.u32 %s102, 1
        %s409 = smul.addr %s408, 2
        %s410 = scalar_lea.vmem [#allocation4], %s409
        // Predicated region
        $region29: #{tpu_custom_call.1} parent=27 // pred_check
          %p411 = pneg %p86
        $region30: #{tpu_custom_call.1} parent=27 // pred_check_branch
          %413 = sbr.rel (%p411) target = $region32
        $region31: #{tpu_custom_call.1} parent=27 // pred_region
          %s414 = smul.u32 8, %s21
          %s416 = ssub.s32 512, 512
          %417 = vsyncadd %s402, %s416
          %s418 = smul.addr %s414, 64
          %s419 = scalar_lea.hbm %s2, %s418
          %s420 = sshll.u32 %s405, 4
          %s421 = int_to_ptr.vmem [resolvable:$true] %s420
          %426 = dma.vmem_to_hbm [thread:$0]  %s421, 512, %s419, %s402, 64, 64, 4
        $region32: #{tpu_custom_call.1} parent=27 // pred_fallthru
          _
        // Predicated region
        $region33: #{tpu_custom_call.1} parent=27 // pred_check
          %p427 = pneg %p112
        $region34: #{tpu_custom_call.1} parent=27 // pred_check_branch
          %429 = sbr.rel (%p427) target = $region36
        $region35: #{tpu_custom_call.1} parent=27 // pred_region
          %s431 = ssub.s32 32, 32
          %432 = vsyncadd %s407, %s431
          %s433 = smul.addr %s21, 32
          %s434 = scalar_lea.hbm %s3, %s433
          %s436 = sshll.u32 %s410, 4
          %s437 = int_to_ptr.vmem [resolvable:$true] %s436
          %439 = dma.vmem_to_hbm [thread:$0]  %s437, 32, %s434, %s407
        $region36: #{tpu_custom_call.1} parent=27 // pred_fallthru
          _
      $region28: #{tpu_custom_call.1} parent=5 // pred_fallthru
        _
      %p440 = scmp.le.s32.totalorder 2, %s16
      // Predicated region
      $region37: #{tpu_custom_call.1} parent=5 // pred_check
        %p441 = pneg %p440
      $region38: #{tpu_custom_call.1} parent=5 // pred_check_branch
        %443 = sbr.rel (%p441) target = $region40
      $region39: #{tpu_custom_call.1} parent=5 // pred_region
        %s444 = ssub.s32 %s16, 2
        // Predicated region
        $region41: #{tpu_custom_call.1} parent=39 // pred_check
          %p445 = pneg %p92
        $region42: #{tpu_custom_call.1} parent=39 // pred_check_branch
          %447 = sbr.rel (%p445) target = $region44
        $region43: #{tpu_custom_call.1} parent=39 // pred_region
          %s448 = sand.u32 %s77, 1
          %s449 = scalar_lea.sflag [#allocation3], %s448
          %s450 = sand.u32 %s77, 1
          %s451 = smul.addr %s450, 32
          %s452 = scalar_lea.vmem [#allocation2], %s451
          %453 = dma.done %s449, 512
        $region44: #{tpu_custom_call.1} parent=39 // pred_fallthru
          _
        // Predicated region
        $region45: #{tpu_custom_call.1} parent=39 // pred_check
          %p454 = pneg %p118
        $region46: #{tpu_custom_call.1} parent=39 // pred_check_branch
          %456 = sbr.rel (%p454) target = $region48
        $region47: #{tpu_custom_call.1} parent=39 // pred_region
          %s457 = sand.u32 %s103, 1
          %s458 = scalar_lea.sflag [#allocation5], %s457
          %s459 = sand.u32 %s103, 1
          %s460 = smul.addr %s459, 2
          %s461 = scalar_lea.vmem [#allocation4], %s460
          %462 = dma.done %s458, 32
        $region48: #{tpu_custom_call.1} parent=39 // pred_fallthru
          _
      $region40: #{tpu_custom_call.1} parent=5 // pred_fallthru
        _
    $region6: #{tpu_custom_call.1} parent=1 // loop_footer
      %s20 = sadd.s32 1, %s16
    $region7: #{tpu_custom_call.1} parent=1 // loop_footer_branch
      %15 = sbr.rel target = $region3
    $region8: #{tpu_custom_call.1} parent=1 // loop_exit
      _
    %463 = vsyncpa [#allocation3], 1
    %s464 = scalar_lea.sflag [#allocation3], 1
    %465 = vsyncpa %s464, 1
    %466 = vsyncpa [#allocation5], 1
    %s467 = scalar_lea.sflag [#allocation5], 1
    %468 = vsyncpa %s467, 1

</llo_original>
